<compile_context>
chip_gen: v7x
topology: tpu7x:2x2x1
jax: 0.10.0
libtpu: 0.0.40
codegen_flags: <defaults>
</compile_context>

<pallas_src>
import functools

import jax
import jax.numpy as jnp
from jax.experimental import pallas as pl
from jax.experimental.pallas import tpu as pltpu

_MARGIN = 2 << 20  # VMEM slack for Mosaic-internal scratch / small temps


def _vmem_budget_bytes():
    """Generation-aware VMEM budget (~40 MiB on v7x, ~80 MiB on v5e/v6e)."""
    try:
        cap = int(pltpu.get_tpu_info().vmem_capacity_bytes)
    except Exception:  # conservative fallback (v7x physical VMEM)
        cap = 64 << 20
    return (cap * 5) // 8


def _divisors_desc(n):
    return [d for d in range(n, 0, -1) if n % d == 0]


# --------------------------------------------------------------------------
# Kernels
# --------------------------------------------------------------------------
def _fused_kernel(x_ref, w1_ref, b1_ref, w2_ref, b2_ref, o_ref, *, k, channels,
                  compute_dtype):
    # x_ref : (B, C, HW)  resident slab of B batch rows
    # w1_ref: (C, Cr)     b1_ref: (1, Cr)
    # w2_ref: (Cr, 2kC)   b2_ref: (1, 2kC)   (columns pre-permuted j-major)
    xf = x_ref[...].astype(jnp.float32)
    theta = jnp.mean(xf, axis=-1)                                      # (B, C)
    h = jnp.dot(theta, w1_ref[...], preferred_element_type=jnp.float32)
    h = jnp.maximum(h + b1_ref[...], 0.0)                              # (B, Cr)
    t = jnp.dot(h, w2_ref[...], preferred_element_type=jnp.float32) + b2_ref[...]
    t = jnp.tanh(0.5 * t)                       # == 2*sigmoid(t) - 1  # (B, 2kC)

    lam = [1.0] * k + [0.5] * k
    ini = [1.0] + [0.0] * (2 * k - 1)

    def coef(j):
        c = t[:, j * channels:(j + 1) * channels] * lam[j] + ini[j]    # (B, C)
        return c.astype(compute_dtype)[:, :, None]                     # (B, C, 1)

    if compute_dtype == jnp.float32:
        x = xf
    else:
        x = x_ref[...].astype(compute_dtype)
    out = x * coef(0) + coef(k)
    for j in range(1, k):                       # k is static (tiny)
        out = jnp.maximum(out, x * coef(j) + coef(k + j))
    o_ref[...] = out.astype(o_ref.dtype)


def _streaming_kernel(x_ref, coef_ref, o_ref, *, k, compute_dtype):
    # x_ref   : (B, C, T)       spatial tile of B batch rows
    # coef_ref: (B, 2k, C, 1)   slopes (0..k-1) / intercepts (k..2k-1)
    x = x_ref[...].astype(compute_dtype)
    a = coef_ref[...].astype(compute_dtype)
    out = x * a[:, 0] + a[:, k]                 # (B, C, 1) broadcasts on lanes
    for j in range(1, k):
        out = jnp.maximum(out, x * a[:, j] + a[:, k + j])
    o_ref[...] = out.astype(o_ref.dtype)


# --------------------------------------------------------------------------
# Block-size selection (streaming path)
# --------------------------------------------------------------------------
def _pick_streaming_blocks(N, C, HW, itemsize, cd_itemsize, budget):
    """Choose (batch_block, hw_tile) targeting ~2 MiB lane-dense blocks."""
    bytes_per_elem = 4 * itemsize + 2 * cd_itemsize   # 2x(in+out) bufs + temps
    target_elems = (2 << 20) // itemsize              # ~2 MiB block
    max_elems = max(C * 128, min(target_elems,
                                 (budget - _MARGIN) // bytes_per_elem))

    if HW < 128:
        # TODO(synk): fold HW (or C) into the lane axis for sub-128-lane layers
        # to avoid masked partial stores; full-HW blocks kept for correctness.
        tile_hw = HW
    elif C * HW <= max_elems:
        tile_hw = HW
    else:
        max_hw = max(128, (max_elems // C) // 128 * 128)
        tile_hw = min((HW // 128) * 128, max_hw)
        for t in range(tile_hw, 127, -128):           # prefer divisor of HW
            if HW % t == 0:
                tile_hw = t
                break

    b_blk = 1
    if tile_hw == HW:                                 # group rows per grid step
        rows = max(1, int(max_elems // max(C * HW, 1)))
        for b in range(min(rows, N), 0, -1):
            if N % b == 0:
                b_blk = b
                break

    # Megacore: make sure the parallel grid has >= 2 steps when possible.
    n_tiles = pl.cdiv(HW, tile_hw)
    if (N // b_blk) * n_tiles < 2:
        if b_blk > 1:
            for b in range(N // 2, 0, -1):
                if N % b == 0:
                    b_blk = b
                    break
        elif HW >= 256:
            tile_hw = (((HW + 1) // 2) + 127) // 128 * 128
    return b_blk, tile_hw


# --------------------------------------------------------------------------
# Wrapper
# --------------------------------------------------------------------------
@functools.partial(jax.jit, static_argnames=("k", "donate_x", "force_streaming"))
def dyrelub_pallas(x_nchw, w1, b1, w2, b2, k=2, donate_x=False,
                   force_streaming=False):
    N, C, H, W = x_nchw.shape
    HW = H * W
    itemsize = x_nchw.dtype.itemsize
    x = x_nchw.reshape(N, C, HW)                      # zero-cost view of NCHW

    Cr = w1.shape[1]
    out2kc = w2.shape[1]
    assert out2kc == 2 * k * C, "fc2 output must be 2*k*channels"

    compute_dtype = jnp.bfloat16 if x.dtype == jnp.bfloat16 else jnp.float32
    cd_itemsize = 2 if compute_dtype == jnp.bfloat16 else 4
    budget = _vmem_budget_bytes()

    slab_bytes = C * HW * itemsize
    weight_bytes = (C * Cr + Cr + Cr * out2kc + out2kc) * 4

    def fused_footprint(b_blk):
        # 2x double-buffered in/out blocks + f32 upcast temp + compute-dtype temp
        return (b_blk * C * HW * (4 * itemsize + 4 + cd_itemsize)
                + 2 * weight_bytes + _MARGIN)

    use_fused = (not force_streaming) and fused_footprint(1) <= budget

    # ---------------- fused single-read path -----------------------------
    if use_fused:
        b_blk = 1
        if slab_bytes < (512 << 10):                  # tiny layers: amortize grid overhead
            for b in _divisors_desc(N):
                if fused_footprint(b) <= budget and (N // b >= 2 or N == 1):
                    b_blk = b
                    break
        nb = N // b_blk

        # Permute fc2 columns to j-major so the kernel can take contiguous
        # static slices t[:, j*C:(j+1)*C] instead of reshaping (B, 2kC)->(B,C,2k).
        w2f = w2.astype(jnp.float32).reshape(Cr, C, 2 * k)
        w2f = jnp.transpose(w2f, (0, 2, 1)).reshape(Cr, 2 * k * C)
        b2f = b2.astype(jnp.float32).reshape(C, 2 * k).T.reshape(1, 2 * k * C)
        w1f = w1.astype(jnp.float32)
        b1f = b1.astype(jnp.float32).reshape(1, Cr)

        cost = pl.CostEstimate(
            flops=int(N * C * HW * (1 + 4 * k) + 2 * N * (C * Cr + Cr * out2kc)),
            transcendentals=int(N * out2kc),
            bytes_accessed=int(2 * N * C * HW * itemsize + weight_bytes))

        out = pl.pallas_call(
            functools.partial(_fused_kernel, k=k, channels=C,
                              compute_dtype=compute_dtype),
            out_shape=jax.ShapeDtypeStruct((N, C, HW), x.dtype),
            grid=(nb,),
            in_specs=[
                pl.BlockSpec((b_blk, C, HW), lambda n: (n, 0, 0)),
                pl.BlockSpec((C, Cr), lambda n: (0, 0)),
                pl.BlockSpec((1, Cr), lambda n: (0, 0)),
                pl.BlockSpec((Cr, 2 * k * C), lambda n: (0, 0)),
                pl.BlockSpec((1, 2 * k * C), lambda n: (0, 0)),
            ],
            out_specs=pl.BlockSpec((b_blk, C, HW), lambda n: (n, 0, 0)),
            compiler_params=pltpu.CompilerParams(
                dimension_semantics=("parallel",),
                vmem_limit_bytes=int(budget)),
            cost_estimate=cost,
            input_output_aliases=({0: 0} if donate_x else {}),
        )(x, w1f, b1f, w2f, b2f)
        return out.reshape(N, C, H, W)

    # ---------------- streaming fallback (3 HBM passes) -------------------
    # Squeeze-MLP (tiny, (N,C)-sized) in plain XLA.
    theta = jnp.mean(x.astype(jnp.float32), axis=-1)                    # (N, C)
    h = jnp.maximum(theta @ w1.astype(jnp.float32) + b1, 0.0)           # (N, Cr)
    t = jnp.tanh(0.5 * (h @ w2.astype(jnp.float32) + b2))               # (N, 2kC)
    lambdas = jnp.array([1.0] * k + [0.5] * k, jnp.float32)
    init_v = jnp.array([1.0] + [0.0] * (2 * k - 1), jnp.float32)
    coefs = t.reshape(N, C, 2 * k) * lambdas + init_v                   # (N, C, 2k)
    coefs = jnp.transpose(coefs, (0, 2, 1))[..., None]                  # (N, 2k, C, 1)

    b_blk, tile_hw = _pick_streaming_blocks(N, C, HW, itemsize, cd_itemsize,
                                            budget)
    nb = pl.cdiv(N, b_blk)
    n_tiles = pl.cdiv(HW, tile_hw)

    cost = pl.CostEstimate(
        flops=int(4 * k * N * C * HW),
        transcendentals=0,
        bytes_accessed=int(2 * N * C * HW * itemsize + N * 2 * k * C * 4))

    out = pl.pallas_call(
        functools.partial(_streaming_kernel, k=k, compute_dtype=compute_dtype),
        out_shape=jax.ShapeDtypeStruct((N, C, HW), x.dtype),
        grid=(nb, n_tiles),
        in_specs=[
            pl.BlockSpec((b_blk, C, tile_hw), lambda n, s: (n, 0, s)),
            pl.BlockSpec((b_blk, 2 * k, C, 1), lambda n, s: (n, 0, 0, 0)),
        ],
        out_specs=pl.BlockSpec((b_blk, C, tile_hw), lambda n, s: (n, 0, s)),
        compiler_params=pltpu.CompilerParams(
            dimension_semantics=("parallel", "parallel"),
            vmem_limit_bytes=int(budget)),
        cost_estimate=cost,
        input_output_aliases=({0: 0} if donate_x else {}),
    )(x, coefs)
    return out.reshape(N, C, H, W)


# --------------------------------------------------------------------------
# Pure-JAX reference (mirror of the PyTorch forward)
# --------------------------------------------------------------------------
def dyrelub_reference(x, w1, b1, w2, b2, k=2):
    N, C, H, W = x.shape
    theta = jnp.mean(jnp.mean(x.astype(jnp.float32), axis=-1), axis=-1)  # (N, C)
    theta = jnp.maximum(theta @ w1 + b1, 0.0)                            # (N, Cr)
    theta = 2.0 * jax.nn.sigmoid(theta @ w2 + b2) - 1.0                  # (N, 2kC)
    lambdas = jnp.array([1.0] * k + [0.5] * k, jnp.float32)
    init_v = jnp.array([1.0] + [0.0] * (2 * k - 1), jnp.float32)
    coefs = theta.reshape(N, C, 2 * k) * lambdas + init_v                # (N, C, 2k)
    a = coefs[:, :, None, None, :k]                                      # (N,C,1,1,k)
    b = coefs[:, :, None, None, k:]
    y = jnp.max(x[..., None].astype(jnp.float32) * a + b, axis=-1)       # (N,C,H,W)
    return y.astype(x.dtype)


if __name__ == "__main__":
    # Small shapes consistent with the module: N=2, C=16, H=W=16, reduction=8, k=2.
    N, C, H, W = 2, 16, 16, 16
    reduction, k = 8, 2
    Cr = C // reduction

    key = jax.random.PRNGKey(0)
    kx, k1, k2, k3, k4 = jax.random.split(key, 5)

    x = jax.random.normal(kx, (N, C, H, W), dtype=jnp.float32)
    # fc weights stored as (in, out); column order of w2 matches view(N, C, 2k).
    w1 = jax.random.normal(k1, (C, Cr), dtype=jnp.float32) * 0.2
    b1 = jax.random.normal(k2, (Cr,), dtype=jnp.float32) * 0.1
    w2 = jax.random.normal(k3, (Cr, 2 * k * C), dtype=jnp.float32) * 0.2
    b2 = jax.random.normal(k4, (2 * k * C,), dtype=jnp.float32) * 0.1

    ref = dyrelub_reference(x, w1, b1, w2, b2, k=k)

    # 1) fused single-HBM-read path (the default for slabs that fit VMEM).
    out = jax.block_until_ready(dyrelub_pallas(x, w1, b1, w2, b2, k=k))
    assert out.shape == (N, C, H, W) and out.dtype == x.dtype
    assert jnp.allclose(out, ref, rtol=1e-4, atol=1e-4), (
        float(jnp.max(jnp.abs(out - ref))))

    # 2) streaming fallback path (forced; exercises the tiled affine+max kernel).
    out_s = jax.block_until_ready(
        dyrelub_pallas(x, w1, b1, w2, b2, k=k, force_streaming=True))
    assert jnp.allclose(out_s, ref, rtol=1e-4, atol=1e-4), (
        float(jnp.max(jnp.abs(out_s - ref))))

    # 3) bf16 input exercises the bf16 compute path.
    xb = x.astype(jnp.bfloat16)
    ref_b = dyrelub_reference(xb, w1, b1, w2, b2, k=k).astype(jnp.float32)
    out_b = jax.block_until_ready(dyrelub_pallas(xb, w1, b1, w2, b2, k=k))
    assert out_b.dtype == jnp.bfloat16
    out_bf = out_b.astype(jnp.float32)
    assert jnp.allclose(out_bf, ref_b, rtol=5e-2, atol=5e-2), (
        float(jnp.max(jnp.abs(out_bf - ref_b))))

    print("KERNEL_OK")
</pallas_src>

<mosaic_0001>
module attributes {stable_mosaic.version = 11 : i64} {
  func.func @_fused_kernel(%arg0: i32, %arg1: memref<1x16x256xf32, #tpu.memory_space<vmem>>, %arg2: memref<16x2xf32, #tpu.memory_space<vmem>>, %arg3: memref<1x2xf32, #tpu.memory_space<vmem>>, %arg4: memref<2x64xf32, #tpu.memory_space<vmem>>, %arg5: memref<1x64xf32, #tpu.memory_space<vmem>>, %arg6: memref<1x16x256xf32, #tpu.memory_space<vmem>>) attributes {dimension_semantics = [#tpu.dimension_semantics<parallel>], iteration_bounds = array<i64: 2>, scalar_prefetch = 0 : i64, scratch_operands = 0 : i64, tpu.core_type = #tpu.core_type<tc>, window_params = [{transform_indices = @transform_0, window_bounds = array<i64: 1, 16, 256>}, {pipeline_mode = #tpu.pipeline_mode<synchronous>, transform_indices = @transform_1, window_bounds = array<i64: 16, 2>}, {pipeline_mode = #tpu.pipeline_mode<synchronous>, transform_indices = @transform_2, window_bounds = array<i64: 1, 2>}, {pipeline_mode = #tpu.pipeline_mode<synchronous>, transform_indices = @transform_3, window_bounds = array<i64: 2, 64>}, {pipeline_mode = #tpu.pipeline_mode<synchronous>, transform_indices = @transform_4, window_bounds = array<i64: 1, 64>}, {transform_indices = @transform_5, window_bounds = array<i64: 1, 16, 256>}]} {
    %c0 = arith.constant 0 : index
    %c0_0 = arith.constant 0 : index
    %c0_1 = arith.constant 0 : index
    %0 = vector.load %arg1[%c0, %c0_0, %c0_1] : memref<1x16x256xf32, #tpu.memory_space<vmem>>, vector<1x16x256xf32>
    %cst = arith.constant dense<0.000000e+00> : vector<1x16xf32>
    %1 = vector.multi_reduction <add>, %0, %cst [2] : vector<1x16x256xf32> to vector<1x16xf32>
    %cst_2 = arith.constant 2.560000e+02 : f32
    %2 = vector.broadcast %cst_2 : f32 to vector<1x16xf32>
    %3 = arith.divf %1, %2 : vector<1x16xf32>
    %c0_3 = arith.constant 0 : index
    %c0_4 = arith.constant 0 : index
    %4 = vector.load %arg2[%c0_3, %c0_4] : memref<16x2xf32, #tpu.memory_space<vmem>>, vector<16x2xf32>
    %cst_5 = arith.constant dense<0.000000e+00> : vector<1x2xf32>
    %5 = tpu.matmul %3, %4, %cst_5 {dimension_numbers = #tpu.dot_dimension_numbers<[1], [0], [0], [1], [0, 0, 1, 1], [], []>} : vector<1x16xf32>, vector<16x2xf32>, vector<1x2xf32> -> vector<1x2xf32>
    %c0_6 = arith.constant 0 : index
    %c0_7 = arith.constant 0 : index
    %6 = vector.load %arg3[%c0_6, %c0_7] : memref<1x2xf32, #tpu.memory_space<vmem>>, vector<1x2xf32>
    %7 = arith.addf %5, %6 : vector<1x2xf32>
    %cst_8 = arith.constant 0.000000e+00 : f32
    %8 = vector.broadcast %cst_8 : f32 to vector<1x2xf32>
    %9 = arith.maximumf %7, %8 : vector<1x2xf32>
    %c0_9 = arith.constant 0 : index
    %c0_10 = arith.constant 0 : index
    %10 = vector.load %arg4[%c0_9, %c0_10] : memref<2x64xf32, #tpu.memory_space<vmem>>, vector<2x64xf32>
    %cst_11 = arith.constant dense<0.000000e+00> : vector<1x64xf32>
    %11 = tpu.matmul %9, %10, %cst_11 {dimension_numbers = #tpu.dot_dimension_numbers<[1], [0], [0], [1], [0, 0, 1, 1], [], []>} : vector<1x2xf32>, vector<2x64xf32>, vector<1x64xf32> -> vector<1x64xf32>
    %c0_12 = arith.constant 0 : index
    %c0_13 = arith.constant 0 : index
    %12 = vector.load %arg5[%c0_12, %c0_13] : memref<1x64xf32, #tpu.memory_space<vmem>>, vector<1x64xf32>
    %13 = arith.addf %11, %12 : vector<1x64xf32>
    %cst_14 = arith.constant 5.000000e-01 : f32
    %14 = vector.broadcast %cst_14 : f32 to vector<1x64xf32>
    %15 = arith.mulf %14, %13 : vector<1x64xf32>
    %16 = math.tanh %15 : vector<1x64xf32>
    %17 = vector.extract_strided_slice %16 {offsets = [0, 0], sizes = [1, 16], strides = [1, 1]} : vector<1x64xf32> to vector<1x16xf32>
    %cst_15 = arith.constant 1.000000e+00 : f32
    %18 = vector.broadcast %cst_15 : f32 to vector<1x16xf32>
    %19 = arith.mulf %17, %18 : vector<1x16xf32>
    %cst_16 = arith.constant 1.000000e+00 : f32
    %20 = vector.broadcast %cst_16 : f32 to vector<1x16xf32>
    %21 = arith.addf %19, %20 : vector<1x16xf32>
    %22 = vector.shape_cast %21 : vector<1x16xf32> to vector<1x16x1xf32>
    %23 = vector.broadcast %22 : vector<1x16x1xf32> to vector<1x16x256xf32>
    %24 = arith.mulf %0, %23 : vector<1x16x256xf32>
    %25 = vector.extract_strided_slice %16 {offsets = [0, 32], sizes = [1, 16], strides = [1, 1]} : vector<1x64xf32> to vector<1x16xf32>
    %cst_17 = arith.constant 5.000000e-01 : f32
    %26 = vector.broadcast %cst_17 : f32 to vector<1x16xf32>
    %27 = arith.mulf %25, %26 : vector<1x16xf32>
    %cst_18 = arith.constant 0.000000e+00 : f32
    %28 = vector.broadcast %cst_18 : f32 to vector<1x16xf32>
    %29 = arith.addf %27, %28 : vector<1x16xf32>
    %30 = vector.shape_cast %29 : vector<1x16xf32> to vector<1x16x1xf32>
    %31 = vector.broadcast %30 : vector<1x16x1xf32> to vector<1x16x256xf32>
    %32 = arith.addf %24, %31 : vector<1x16x256xf32>
    %33 = vector.extract_strided_slice %16 {offsets = [0, 16], sizes = [1, 16], strides = [1, 1]} : vector<1x64xf32> to vector<1x16xf32>
    %cst_19 = arith.constant 1.000000e+00 : f32
    %34 = vector.broadcast %cst_19 : f32 to vector<1x16xf32>
    %35 = arith.mulf %33, %34 : vector<1x16xf32>
    %cst_20 = arith.constant 0.000000e+00 : f32
    %36 = vector.broadcast %cst_20 : f32 to vector<1x16xf32>
    %37 = arith.addf %35, %36 : vector<1x16xf32>
    %38 = vector.shape_cast %37 : vector<1x16xf32> to vector<1x16x1xf32>
    %39 = vector.broadcast %38 : vector<1x16x1xf32> to vector<1x16x256xf32>
    %40 = arith.mulf %0, %39 : vector<1x16x256xf32>
    %41 = vector.extract_strided_slice %16 {offsets = [0, 48], sizes = [1, 16], strides = [1, 1]} : vector<1x64xf32> to vector<1x16xf32>
    %cst_21 = arith.constant 5.000000e-01 : f32
    %42 = vector.broadcast %cst_21 : f32 to vector<1x16xf32>
    %43 = arith.mulf %41, %42 : vector<1x16xf32>
    %cst_22 = arith.constant 0.000000e+00 : f32
    %44 = vector.broadcast %cst_22 : f32 to vector<1x16xf32>
    %45 = arith.addf %43, %44 : vector<1x16xf32>
    %46 = vector.shape_cast %45 : vector<1x16xf32> to vector<1x16x1xf32>
    %47 = vector.broadcast %46 : vector<1x16x1xf32> to vector<1x16x256xf32>
    %48 = arith.addf %40, %47 : vector<1x16x256xf32>
    %49 = arith.maximumf %32, %48 : vector<1x16x256xf32>
    %c0_23 = arith.constant 0 : index
    %c0_24 = arith.constant 0 : index
    %c0_25 = arith.constant 0 : index
    %50 = vector.load %arg6[%c0_23, %c0_24, %c0_25] : memref<1x16x256xf32, #tpu.memory_space<vmem>>, vector<1x16x256xf32>
    tpu.vector_store %arg6[%c0_23, %c0_24, %c0_25], %49 {strides = array<i32>} : memref<1x16x256xf32, #tpu.memory_space<vmem>>, vector<1x16x256xf32>,
    return
  }
  func.func @transform_0(%arg0: i32) -> (i32, i32, i32) {
    %c0_i32 = arith.constant 0 : i32
    %c0_i32_0 = arith.constant 0 : i32
    %c0_i32_1 = arith.constant 0 : i32
    return %arg0, %c0_i32, %c0_i32_0 : i32, i32, i32
  }
  func.func @transform_1(%arg0: i32) -> (i32, i32) {
    %c0_i32 = arith.constant 0 : i32
    %c0_i32_0 = arith.constant 0 : i32
    %c0_i32_1 = arith.constant 0 : i32
    return %c0_i32, %c0_i32_0 : i32, i32
  }
  func.func @transform_2(%arg0: i32) -> (i32, i32) {
    %c0_i32 = arith.constant 0 : i32
    %c0_i32_0 = arith.constant 0 : i32
    %c0_i32_1 = arith.constant 0 : i32
    return %c0_i32, %c0_i32_0 : i32, i32
  }
  func.func @transform_3(%arg0: i32) -> (i32, i32) {
    %c0_i32 = arith.constant 0 : i32
    %c0_i32_0 = arith.constant 0 : i32
    %c0_i32_1 = arith.constant 0 : i32
    return %c0_i32, %c0_i32_0 : i32, i32
  }
  func.func @transform_4(%arg0: i32) -> (i32, i32) {
    %c0_i32 = arith.constant 0 : i32
    %c0_i32_0 = arith.constant 0 : i32
    %c0_i32_1 = arith.constant 0 : i32
    return %c0_i32, %c0_i32_0 : i32, i32
  }
  func.func @transform_5(%arg0: i32) -> (i32, i32, i32) {
    %c0_i32 = arith.constant 0 : i32
    %c0_i32_0 = arith.constant 0 : i32
    %c0_i32_1 = arith.constant 0 : i32
    return %arg0, %c0_i32, %c0_i32_0 : i32, i32, i32
  }
}

</mosaic_0001>

<llo_original>
// kernel: dyrelub_pallas.1
$region0: #{dyrelub_pallas.1}
  #allocation0 [shape = 'u32[]', space=smem, size = 0x4, offset = 0x4, fixed_abs, tag = 'smem constant byte address 0x4 - core index']
  #allocation1 [shape = 'u32[144,128]{1,0:T(1,128)}', space=vmem, size = 0x12000, scoped, tag = 'internal scratch']
  %s0 = inlined_call_operand.vmem [shape: f32[2,16,256], index: 0, kind: input, shape index: {}]
  %s1 = inlined_call_operand.vmem [shape: f32[16,2], index: 1, kind: input, shape index: {}]
  %s2 = inlined_call_operand.vmem [shape: f32[1,2], index: 2, kind: input, shape index: {}]
  %s3 = inlined_call_operand.vmem [shape: f32[2,64], index: 3, kind: input, shape index: {}]
  %s4 = inlined_call_operand.vmem [shape: f32[1,64], index: 4, kind: input, shape index: {}]
  %s5 = inlined_call_operand.vmem [shape: f32[2,16,256], index: 5, kind: output, shape index: {}]
  %s6 = sld [smem:[#allocation0]]
  $region53: #{dyrelub_pallas.1} parent=0
    _
  %s8 = ssub.s32 1, %s6
  %s9 = scalar_select 0, %s8, %s6
  loop: start=0, step=1, limit=4
  $region2: #{dyrelub_pallas.1} parent=0 // loop_pre_header
    _
  $region3: #{dyrelub_pallas.1} parent=0 // loop_header
    %s11 = sphi 0, %s15
    %p12 = scmp.ge.s32.totalorder %s11, 4
    %s21 = sphi 0, %s23
    %s24 = sphi 0, %s21
    %s25 = sphi 0, %s24
    %s41 = sphi 0, %s25
    %s45 = sphi 0, %s45
    %s47 = sphi 0, %s45
    %s48 = sphi 0, %s47
    %s62 = sphi 0, %s48
    %s66 = sphi 0, %s66
    %s68 = sphi 0, %s66
    %s69 = sphi 0, %s68
    %s83 = sphi 0, %s69
    %s87 = sphi 0, %s87
    %s89 = sphi 0, %s87
    %s90 = sphi 0, %s89
    %s104 = sphi 0, %s90
    %s108 = sphi 0, %s108
    %s110 = sphi 0, %s108
    %s111 = sphi 0, %s110
    %s125 = sphi 0, %s111
    %s131 = sphi 0, %s133
    %s134 = sphi 0, %s131
    %s135 = sphi 0, %s134
    %s151 = sphi 0, %s135
  $region4: #{dyrelub_pallas.1} parent=0 // loop_header_branch
    %14 = sbr.rel (%p12) target = $region8
  $region5: #{dyrelub_pallas.1} parent=0 // loop_body
    %s16 = ssub.s32 %s11, 1
    %s17 = ssub.s32 %s11, 2
    %s18 = sadd.s32 %s11, 1
    %s19 = ssub.s32 %s11, %s18
    %p20 = scmp.eq.s32.totalorder %s19, 0
    %s22 = sadd.s32 %s21, 1
    %s23 = scalar_select %p20, %s21, %s22
    %p26 = pneg %p20
    %p27 = scmp.eq.s32.totalorder %s11, 1
    %p28 = por %p26, %p27
    %p29 = scmp.ne.s32.totalorder %s21, %s24
    %p30 = scmp.eq.s32.totalorder %s11, 0
    %p31 = por %p29, %p30
    %p32 = scmp.ne.s32.totalorder %s21, %s24
    %p33 = scmp.eq.s32.totalorder %s16, 1
    %p34 = por %p32, %p33
    %p35 = scmp.ne.s32.totalorder %s24, %s25
    %p36 = scmp.eq.s32.totalorder %s16, 0
    %p37 = por %p35, %p36
    %p38 = scmp.ne.s32.totalorder %s24, %s25
    %p39 = scmp.eq.s32.totalorder %s17, 1
    %p40 = por %p38, %p39
    %p42 = scmp.ne.s32.totalorder %s25, %s41
    %p43 = scmp.eq.s32.totalorder %s17, 0
    %p44 = por %p42, %p43
    %s46 = sadd.s32 %s45, 1
    %p49 = scmp.eq.s32.totalorder %s11, 1
    %p50 = scmp.ne.s32.totalorder %s45, %s47
    %p51 = scmp.eq.s32.totalorder %s11, 0
    %p52 = por %p50, %p51
    %p53 = scmp.ne.s32.totalorder %s45, %s47
    %p54 = scmp.eq.s32.totalorder %s16, 1
    %p55 = por %p53, %p54
    %p56 = scmp.ne.s32.totalorder %s47, %s48
    %p57 = scmp.eq.s32.totalorder %s16, 0
    %p58 = por %p56, %p57
    %p59 = scmp.ne.s32.totalorder %s47, %s48
    %p60 = scmp.eq.s32.totalorder %s17, 1
    %p61 = por %p59, %p60
    %p63 = scmp.ne.s32.totalorder %s48, %s62
    %p64 = scmp.eq.s32.totalorder %s17, 0
    %p65 = por %p63, %p64
    %s67 = sadd.s32 %s66, 1
    %p70 = scmp.eq.s32.totalorder %s11, 1
    %p71 = scmp.ne.s32.totalorder %s66, %s68
    %p72 = scmp.eq.s32.totalorder %s11, 0
    %p73 = por %p71, %p72
    %p74 = scmp.ne.s32.totalorder %s66, %s68
    %p75 = scmp.eq.s32.totalorder %s16, 1
    %p76 = por %p74, %p75
    %p77 = scmp.ne.s32.totalorder %s68, %s69
    %p78 = scmp.eq.s32.totalorder %s16, 0
    %p79 = por %p77, %p78
    %p80 = scmp.ne.s32.totalorder %s68, %s69
    %p81 = scmp.eq.s32.totalorder %s17, 1
    %p82 = por %p80, %p81
    %p84 = scmp.ne.s32.totalorder %s69, %s83
    %p85 = scmp.eq.s32.totalorder %s17, 0
    %p86 = por %p84, %p85
    %s88 = sadd.s32 %s87, 1
    %p91 = scmp.eq.s32.totalorder %s11, 1
    %p92 = scmp.ne.s32.totalorder %s87, %s89
    %p93 = scmp.eq.s32.totalorder %s11, 0
    %p94 = por %p92, %p93
    %p95 = scmp.ne.s32.totalorder %s87, %s89
    %p96 = scmp.eq.s32.totalorder %s16, 1
    %p97 = por %p95, %p96
    %p98 = scmp.ne.s32.totalorder %s89, %s90
    %p99 = scmp.eq.s32.totalorder %s16, 0
    %p100 = por %p98, %p99
    %p101 = scmp.ne.s32.totalorder %s89, %s90
    %p102 = scmp.eq.s32.totalorder %s17, 1
    %p103 = por %p101, %p102
    %p105 = scmp.ne.s32.totalorder %s90, %s104
    %p106 = scmp.eq.s32.totalorder %s17, 0
    %p107 = por %p105, %p106
    %s109 = sadd.s32 %s108, 1
    %p112 = scmp.eq.s32.totalorder %s11, 1
    %p113 = scmp.ne.s32.totalorder %s108, %s110
    %p114 = scmp.eq.s32.totalorder %s11, 0
    %p115 = por %p113, %p114
    %p116 = scmp.ne.s32.totalorder %s108, %s110
    %p117 = scmp.eq.s32.totalorder %s16, 1
    %p118 = por %p116, %p117
    %p119 = scmp.ne.s32.totalorder %s110, %s111
    %p120 = scmp.eq.s32.totalorder %s16, 0
    %p121 = por %p119, %p120
    %p122 = scmp.ne.s32.totalorder %s110, %s111
    %p123 = scmp.eq.s32.totalorder %s17, 1
    %p124 = por %p122, %p123
    %p126 = scmp.ne.s32.totalorder %s111, %s125
    %p127 = scmp.eq.s32.totalorder %s17, 0
    %p128 = por %p126, %p127
    %s129 = ssub.s32 %s11, %s18
    %p130 = scmp.eq.s32.totalorder %s129, 0
    %s132 = sadd.s32 %s131, 1
    %s133 = scalar_select %p130, %s131, %s132
    %p136 = pneg %p130
    %p137 = scmp.eq.s32.totalorder %s11, 1
    %p138 = por %p136, %p137
    %p139 = scmp.ne.s32.totalorder %s131, %s134
    %p140 = scmp.eq.s32.totalorder %s11, 0
    %p141 = por %p139, %p140
    %p142 = scmp.ne.s32.totalorder %s131, %s134
    %p143 = scmp.eq.s32.totalorder %s16, 1
    %p144 = por %p142, %p143
    %p145 = scmp.ne.s32.totalorder %s134, %s135
    %p146 = scmp.eq.s32.totalorder %s16, 0
    %p147 = por %p145, %p146
    %p148 = scmp.ne.s32.totalorder %s134, %s135
    %p149 = scmp.eq.s32.totalorder %s17, 1
    %p150 = por %p148, %p149
    %p152 = scmp.ne.s32.totalorder %s135, %s151
    %p153 = scmp.eq.s32.totalorder %s17, 0
    %p154 = por %p152, %p153
    %p155 = scmp.le.s32.totalorder 1, %s11
    %p156 = scmp.lt.s32.totalorder %s11, 3
    %p157 = pnand %p155, %p156
    %p158 = pneg %p157
    // Predicated region
    $region9: #{dyrelub_pallas.1} parent=5 // pred_check
      _
    $region10: #{dyrelub_pallas.1} parent=5 // pred_check_branch
      %160 = sbr.rel (%p157) target = $region12
    $region11: #{dyrelub_pallas.1} parent=5 // pred_region
      %s161 = ssub.s32 %s11, 1
      // Predicated region
      $region13: #{dyrelub_pallas.1} parent=11 // pred_check
        %p162 = pneg %p58
      $region14: #{dyrelub_pallas.1} parent=11 // pred_check_branch
        %164 = sbr.rel (%p162) target = $region16
      $region15: #{dyrelub_pallas.1} parent=11 // pred_region
        _
      $region16: #{dyrelub_pallas.1} parent=11 // pred_fallthru
        _
      // Predicated region
      $region17: #{dyrelub_pallas.1} parent=11 // pred_check
        %p165 = pneg %p79
      $region18: #{dyrelub_pallas.1} parent=11 // pred_check_branch
        %167 = sbr.rel (%p165) target = $region20
      $region19: #{dyrelub_pallas.1} parent=11 // pred_region
        _
      $region20: #{dyrelub_pallas.1} parent=11 // pred_fallthru
        _
      // Predicated region
      $region21: #{dyrelub_pallas.1} parent=11 // pred_check
        %p168 = pneg %p100
      $region22: #{dyrelub_pallas.1} parent=11 // pred_check_branch
        %170 = sbr.rel (%p168) target = $region24
      $region23: #{dyrelub_pallas.1} parent=11 // pred_region
        _
      $region24: #{dyrelub_pallas.1} parent=11 // pred_fallthru
        _
      // Predicated region
      $region25: #{dyrelub_pallas.1} parent=11 // pred_check
        %p171 = pneg %p121
      $region26: #{dyrelub_pallas.1} parent=11 // pred_check_branch
        %173 = sbr.rel (%p171) target = $region28
      $region27: #{dyrelub_pallas.1} parent=11 // pred_region
        _
      $region28: #{dyrelub_pallas.1} parent=11 // pred_fallthru
        _
    $region12: #{dyrelub_pallas.1} parent=5 // pred_fallthru
      _
    %p174 = scmp.lt.s32.totalorder %s11, 2
    // Predicated region
    $region29: #{dyrelub_pallas.1} parent=5 // pred_check
      %p175 = pneg %p174
    $region30: #{dyrelub_pallas.1} parent=5 // pred_check_branch
      %177 = sbr.rel (%p175) target = $region32
    $region31: #{dyrelub_pallas.1} parent=5 // pred_region
      // Predicated region
      $region33: #{dyrelub_pallas.1} parent=31 // pred_check
        %p178 = pneg %p31
      $region34: #{dyrelub_pallas.1} parent=31 // pred_check_branch
        %180 = sbr.rel (%p178) target = $region36
      $region35: #{dyrelub_pallas.1} parent=31 // pred_region
        %p181 = scmp.lt.s32.totalorder %s11, 1
        %s182 = scalar_select %p181, %s11, 1
        %s183 = smul.addr %s182, 4
        %s184 = smul.addr %s183, 8
        %s185 = scalar_lea.vmem %s0, %s184
      $region36: #{dyrelub_pallas.1} parent=31 // pred_fallthru
        _
    $region32: #{dyrelub_pallas.1} parent=5 // pred_fallthru
      _
    %p186 = scmp.le.s32.totalorder 1, %s11
    %p187 = scmp.lt.s32.totalorder %s11, 3
    %p188 = pnand %p186, %p187
    %p189 = pneg %p188
    // Predicated region
    $region37: #{dyrelub_pallas.1} parent=5 // pred_check
      _
    $region38: #{dyrelub_pallas.1} parent=5 // pred_check_branch
      %191 = sbr.rel (%p188) target = $region40
    $region39: #{dyrelub_pallas.1} parent=5 // pred_region
      %s192 = ssub.s32 %s11, 1
      %p193 = scmp.lt.s32.totalorder %s16, 1
      %s194 = scalar_select %p193, %s16, 1
      %s195 = smul.addr %s194, 4
      %s196 = smul.addr %s195, 8
      %s197 = scalar_lea.vmem %s0, %s196
      %p198 = pneg %p37
      %p199 = pneg %p34
      %p200 = pneg %p58
      %p201 = pneg %p55
      %p202 = pneg %p79
      %p203 = pneg %p76
      %p204 = pneg %p100
      %p205 = pneg %p97
      %p206 = pneg %p121
      %p207 = pneg %p118
      %p208 = pneg %p147
      %p209 = pneg %p144
      %p210 = scmp.lt.s32.totalorder %s16, 1
      %s211 = scalar_select %p210, %s16, 1
      %s212 = smul.addr %s211, 4
      %s213 = smul.addr %s212, 8
      %s214 = scalar_lea.vmem %s5, %s213
      %p215 = scmp.lt.s32.totalorder %s16, 1
      %s216 = scalar_select %p215, %s16, 1
      %s217 = smul.addr %s216, 4
      %s218 = smul.addr %s217, 8
      %s219 = scalar_lea.vmem %s0, %s218
      %p220 = scmp.lt.s32.totalorder %s16, 1
      %s221 = scalar_select %p220, %s16, 1
      %s222 = smul.addr %s221, 4
      %s223 = smul.addr %s222, 8
      %s224 = scalar_lea.vmem %s5, %s223
      %v225 = vld [vmem:[%s219] sm:$0xff]
      %v226 = vld [vmem:[%s219 + $0x8] sm:$0xff]
      %v227 = vld [vmem:[%s219 + $0x10] sm:$0xff]
      %v228 = vld [vmem:[%s219 + $0x18] sm:$0xff]
      %v229 = vadd.f32 %v225, %v226
      %230 = vadd.xlane.f32.xlu0 %v229
      %v231 = vpop.xlane.xlu0 %230
      %v232 = vadd.f32 %v227, %v228
      %233 = vadd.xlane.f32.xlu0 %v232
      %v234 = vpop.xlane.xlu0 %233
      %v235 = vrcp.pop 256.0
      %v236 = vmul.f32 %v231, %v235
      %v237 = vmul.f32 %v234, %v235
      %v238 = vld [vmem:[%s1] sm:$0xff]
      %v239 = vld [vmem:[%s1 + $0x8] sm:$0xff]
      %v240 = vld [vmem:[%s2] sm:$0x1]
      %v243 = vlaneseq
      %v244 = vand.u32 %v243, 127
      %v245 = vlaneseq
      %v246 = vshrl.u32 %v245, 7
      %v247 = vsub.s32 %v244, %v246
      %v248 = vrot.slane %v236, %v247
      %v249 = vadd.s32 %v244, 4294967288
      %v250 = vlaneseq
      %v251 = vshrl.u32 %v250, 7
      %v252 = vsub.s32 %v249, %v251
      %v253 = vrot.slane %v237, %v252
      %vm254 = vcmask 130112
      %v255 = vsel %vm254, %v253, %v248
      %vm256 = vcmask 130048
      %v257 = vsel %vm256, %v255, 0
      %259 = vmatprep.subr.mxu0 0.0
      %260 = vmatpush1.msra.mxu0 %v238
      %261 = vmatprep.subr.mxu0 0.0
      %262 = vmatpush1.msra.mxu0 %v239
      %263 = vmatprep.subr.mxu0 0.0
      %264 = vmatpush1.msra.mxu0 0.0
      %265 = vmatprep.subr.mxu0 0.0
      %266 = vmatpush1.msra.mxu0 0.0
      %267 = vmatprep.subr.mxu0 0.0
      %268 = vmatpush1.msra.mxu0 0.0
      %269 = vmatprep.subr.mxu0 0.0
      %270 = vmatpush1.msra.mxu0 0.0
      %271 = vmatprep.subr.mxu0 0.0
      %272 = vmatpush1.msra.mxu0 0.0
      %273 = vmatprep.subr.mxu0 0.0
      %274 = vmatpush1.msra.mxu0 0.0
      %275 = vmatprep.subr.mxu0 0.0
      %276 = vmatpush1.msra.mxu0 0.0
      %277 = vmatprep.subr.mxu0 0.0
      %278 = vmatpush1.msra.mxu0 0.0
      %279 = vmatprep.subr.mxu0 0.0
      %280 = vmatpush1.msra.mxu0 0.0
      %281 = vmatprep.subr.mxu0 0.0
      %282 = vmatpush1.msra.mxu0 0.0
      %283 = vmatprep.subr.mxu0 0.0
      %284 = vmatpush1.msra.mxu0 0.0
      %285 = vmatprep.subr.mxu0 0.0
      %286 = vmatpush1.msra.mxu0 0.0
      %287 = vmatprep.subr.mxu0 0.0
      %288 = vmatpush1.msra.mxu0 0.0
      %289 = vmatprep.subr.mxu0 0.0
      %290 = vmatpush1.msra.mxu0 0.0
      %291 = vmatprep.subr.mxu0 0.0
      %292 = vmatpush1.msra.mxu0 0.0
      %293 = vmatprep.subr.mxu0 0.0
      %294 = vmatpush1.msra.mxu0 0.0
      %295 = vmatprep.subr.mxu0 0.0
      %296 = vmatpush1.msra.mxu0 0.0
      %297 = vmatprep.subr.mxu0 0.0
      %298 = vmatpush1.msra.mxu0 0.0
      %299 = vmatprep.subr.mxu0 0.0
      %300 = vmatpush1.msra.mxu0 0.0
      %301 = vmatprep.subr.mxu0 0.0
      %302 = vmatpush1.msra.mxu0 0.0
      %303 = vmatprep.subr.mxu0 0.0
      %304 = vmatpush1.msra.mxu0 0.0
      %305 = vmatprep.subr.mxu0 0.0
      %306 = vmatpush1.msra.mxu0 0.0
      %307 = vmatprep.subr.mxu0 0.0
      %308 = vmatpush1.msra.mxu0 0.0
      %309 = vmatprep.subr.mxu0 0.0
      %310 = vmatpush1.msra.mxu0 0.0
      %311 = vmatprep.subr.mxu0 0.0
      %312 = vmatpush1.msra.mxu0 0.0
      %313 = vmatprep.subr.mxu0 0.0
      %314 = vmatpush1.msra.mxu0 0.0
      %315 = vmatprep.subr.mxu0 0.0
      %316 = vmatpush1.msra.mxu0 0.0
      %317 = vmatprep.subr.mxu0 0.0
      %318 = vmatpush1.msra.mxu0 0.0
      %319 = vmatprep.subr.mxu0 0.0
      %320 = vmatpush1.msra.mxu0 0.0
      %321 = vmatprep.subr.mxu0 0.0
      %322 = vmatpush1.msra.mxu0 0.0
      %323 = vmatprep.mubr.f32.mxu0 0.0
      %324 = vmatmul.mubr.f32.gmra.mrb[0].mxu0 %v257
      %v325 = vpop.f32.mrb[0].mxu0
      %v326 = vadd.f32 %v240, %v325
      %v327 = vpop.f32.mrb[0].mxu0
      %328 = vdwg.mxu0
      %v329 = vmax.f32 %v326, 0.0
      %v330 = vld [vmem:[%s3] sm:$0x3]
      %v331 = vld [vmem:[%s4] sm:$0x1]
      %vm332 = vcmask 15360
      %v334 = vsel %vm332, %v329, 0
      %vm336 = vcmask 1041408
      %v338 = vsel %vm336, %v330, 0
      %340 = vmatprep.subr.mxu0 0.0
      %341 = vmatpush1.msra.mxu0 %v338
      %342 = vmatprep.subr.mxu0 0.0
      %343 = vmatpush1.msra.mxu0 0.0
      %344 = vmatprep.subr.mxu0 0.0
      %345 = vmatpush1.msra.mxu0 0.0
      %346 = vmatprep.subr.mxu0 0.0
      %347 = vmatpush1.msra.mxu0 0.0
      %348 = vmatprep.subr.mxu0 0.0
      %349 = vmatpush1.msra.mxu0 0.0
      %350 = vmatprep.subr.mxu0 0.0
      %351 = vmatpush1.msra.mxu0 0.0
      %352 = vmatprep.subr.mxu0 0.0
      %353 = vmatpush1.msra.mxu0 0.0
      %354 = vmatprep.subr.mxu0 0.0
      %355 = vmatpush1.msra.mxu0 0.0
      %356 = vmatprep.subr.mxu0 0.0
      %357 = vmatpush1.msra.mxu0 0.0
      %358 = vmatprep.subr.mxu0 0.0
      %359 = vmatpush1.msra.mxu0 0.0
      %360 = vmatprep.subr.mxu0 0.0
      %361 = vmatpush1.msra.mxu0 0.0
      %362 = vmatprep.subr.mxu0 0.0
      %363 = vmatpush1.msra.mxu0 0.0
      %364 = vmatprep.subr.mxu0 0.0
      %365 = vmatpush1.msra.mxu0 0.0
      %366 = vmatprep.subr.mxu0 0.0
      %367 = vmatpush1.msra.mxu0 0.0
      %368 = vmatprep.subr.mxu0 0.0
      %369 = vmatpush1.msra.mxu0 0.0
      %370 = vmatprep.subr.mxu0 0.0
      %371 = vmatpush1.msra.mxu0 0.0
      %372 = vmatprep.subr.mxu0 0.0
      %373 = vmatpush1.msra.mxu0 0.0
      %374 = vmatprep.subr.mxu0 0.0
      %375 = vmatpush1.msra.mxu0 0.0
      %376 = vmatprep.subr.mxu0 0.0
      %377 = vmatpush1.msra.mxu0 0.0
      %378 = vmatprep.subr.mxu0 0.0
      %379 = vmatpush1.msra.mxu0 0.0
      %380 = vmatprep.subr.mxu0 0.0
      %381 = vmatpush1.msra.mxu0 0.0
      %382 = vmatprep.subr.mxu0 0.0
      %383 = vmatpush1.msra.mxu0 0.0
      %384 = vmatprep.subr.mxu0 0.0
      %385 = vmatpush1.msra.mxu0 0.0
      %386 = vmatprep.subr.mxu0 0.0
      %387 = vmatpush1.msra.mxu0 0.0
      %388 = vmatprep.subr.mxu0 0.0
      %389 = vmatpush1.msra.mxu0 0.0
      %390 = vmatprep.subr.mxu0 0.0
      %391 = vmatpush1.msra.mxu0 0.0
      %392 = vmatprep.subr.mxu0 0.0
      %393 = vmatpush1.msra.mxu0 0.0
      %394 = vmatprep.subr.mxu0 0.0
      %395 = vmatpush1.msra.mxu0 0.0
      %396 = vmatprep.subr.mxu0 0.0
      %397 = vmatpush1.msra.mxu0 0.0
      %398 = vmatprep.subr.mxu0 0.0
      %399 = vmatpush1.msra.mxu0 0.0
      %400 = vmatprep.subr.mxu0 0.0
      %401 = vmatpush1.msra.mxu0 0.0
      %402 = vmatprep.subr.mxu0 0.0
      %403 = vmatpush1.msra.mxu0 0.0
      %404 = vmatprep.mubr.f32.mxu0 0.0
      %405 = vmatmul.mubr.f32.gmra.mrb[0].mxu0 %v334
      %v406 = vpop.f32.mrb[0].mxu0
      %v407 = vadd.f32 %v331, %v406
      %v408 = vpop.f32.mrb[0].mxu0
      %409 = vdwg.mxu0
      %v410 = vmul.f32 %v407, 0.5
      %v411 = vtanh.pop %v410
      %v412 = vadd.f32 %v411, 1.0
      %v413 = vlaneseq
      %v414 = vshrl.u32 %v413, 7
      %v415 = vsub.s32 0, %v414
      %v416 = vrot.slane %v412, %v415
      %418 = vbcast.lane.b32.xlu0 %v416, 256
      %v419 = vpop.permute.xlu0 %418
      %s421 = sor.u32 256, 8
      %422 = vbcast.lane.b32.xlu0 %v416, %s421
      %v423 = vpop.permute.xlu0 %422
      %v424 = vmul.f32 %v225, %v419
      %v425 = vmul.f32 %v226, %v419
      %v426 = vmul.f32 %v227, %v423
      %v427 = vmul.f32 %v228, %v423
      %v428 = vmul.f32 %v411, 0.5
      %v429 = vadd.f32 %v428, 0.0
      %v430 = vlaneseq
      %v431 = vshrl.u32 %v430, 7
      %v432 = vsub.s32 0, %v431
      %v433 = vrot.slane %v429, %v432
      %s435 = sor.u32 256, 32
      %436 = vbcast.lane.b32.xlu0 %v433, %s435
      %v437 = vpop.permute.xlu0 %436
      %s439 = sor.u32 256, 40
      %440 = vbcast.lane.b32.xlu0 %v433, %s439
      %v441 = vpop.permute.xlu0 %440
      %v442 = vadd.f32 %v424, %v437
      %v443 = vadd.f32 %v425, %v437
      %v444 = vadd.f32 %v426, %v441
      %v445 = vadd.f32 %v427, %v441
      %v446 = vadd.f32 %v411, 0.0
      %v447 = vlaneseq
      %v448 = vshrl.u32 %v447, 7
      %v449 = vsub.s32 0, %v448
      %v450 = vrot.slane %v446, %v449
      %s452 = sor.u32 256, 16
      %453 = vbcast.lane.b32.xlu0 %v450, %s452
      %v454 = vpop.permute.xlu0 %453
      %s456 = sor.u32 256, 24
      %457 = vbcast.lane.b32.xlu0 %v450, %s456
      %v458 = vpop.permute.xlu0 %457
      %v459 = vmul.f32 %v225, %v454
      %v460 = vmul.f32 %v226, %v454
      %v461 = vmul.f32 %v227, %v458
      %v462 = vmul.f32 %v228, %v458
      %s464 = sor.u32 256, 48
      %465 = vbcast.lane.b32.xlu0 %v433, %s464
      %v466 = vpop.permute.xlu0 %465
      %s468 = sor.u32 256, 56
      %469 = vbcast.lane.b32.xlu0 %v433, %s468
      %v470 = vpop.permute.xlu0 %469
      %v471 = vadd.f32 %v459, %v466
      %v472 = vadd.f32 %v460, %v466
      %v473 = vadd.f32 %v461, %v470
      %v474 = vadd.f32 %v462, %v470
      %v475 = vmax.f32 %v442, %v471
      %v476 = vmax.f32 %v443, %v472
      %v477 = vmax.f32 %v444, %v473
      %v478 = vmax.f32 %v445, %v474
      %479 = vst [vmem:[%s224] sm:$0xff] %v475
      %480 = vst [vmem:[%s224 + $0x8] sm:$0xff] %v476
      %481 = vst [vmem:[%s224 + $0x10] sm:$0xff] %v477
      %482 = vst [vmem:[%s224 + $0x18] sm:$0xff] %v478
      %p483 = scmp.lt.s32.totalorder %s16, 1
      %s484 = scalar_select %p483, %s16, 1
      %s485 = smul.addr %s484, 4
      %s486 = smul.addr %s485, 8
      %s487 = scalar_lea.vmem %s5, %s486
      // Predicated region
      $region41: #{dyrelub_pallas.1} parent=39 // pred_check
        %p488 = pneg %p144
      $region42: #{dyrelub_pallas.1} parent=39 // pred_check_branch
        %490 = sbr.rel (%p488) target = $region44
      $region43: #{dyrelub_pallas.1} parent=39 // pred_region
        _
      $region44: #{dyrelub_pallas.1} parent=39 // pred_fallthru
        _
    $region40: #{dyrelub_pallas.1} parent=5 // pred_fallthru
      _
    %p491 = scmp.le.s32.totalorder 2, %s11
    // Predicated region
    $region45: #{dyrelub_pallas.1} parent=5 // pred_check
      %p492 = pneg %p491
    $region46: #{dyrelub_pallas.1} parent=5 // pred_check_branch
      %494 = sbr.rel (%p492) target = $region48
    $region47: #{dyrelub_pallas.1} parent=5 // pred_region
      %s495 = ssub.s32 %s11, 2
      // Predicated region
      $region49: #{dyrelub_pallas.1} parent=47 // pred_check
        %p496 = pneg %p150
      $region50: #{dyrelub_pallas.1} parent=47 // pred_check_branch
        %498 = sbr.rel (%p496) target = $region52
      $region51: #{dyrelub_pallas.1} parent=47 // pred_region
        %p499 = scmp.lt.s32.totalorder %s17, 1
        %s500 = scalar_select %p499, %s17, 1
        %s501 = smul.addr %s500, 4
        %s502 = smul.addr %s501, 8
        %s503 = scalar_lea.vmem %s5, %s502
      $region52: #{dyrelub_pallas.1} parent=47 // pred_fallthru
        _
    $region48: #{dyrelub_pallas.1} parent=5 // pred_fallthru
      _
  $region6: #{dyrelub_pallas.1} parent=0 // loop_footer
    %s15 = sadd.s32 1, %s11
  $region7: #{dyrelub_pallas.1} parent=0 // loop_footer_branch
    %10 = sbr.rel target = $region3
  $region8: #{dyrelub_pallas.1} parent=0 // loop_exit
    _

</llo_original>
